<compile_context>
chip_gen: v7x
topology: tpu7x:2x2x1
jax: 0.10.0
libtpu: 0.0.40
codegen_flags: <defaults>
</compile_context>

<pallas_src>
import jax
import jax.numpy as jnp
from jax.experimental import pallas as pl
from jax.experimental.pallas import tpu as pltpu


def _choose_tile(feat, n, esize, cap_bytes):
    """Largest multiple-of-128 divisor of `feat` with n*T*esize <= cap_bytes.

    Returns None if feat is not a multiple of 128 (rare fallback path).
    """
    if feat % 128 != 0:
        return None
    max_lanes = max(128, (cap_bytes // (n * esize)) // 128 * 128)
    best = 128
    t = 128
    limit = min(feat, max_lanes)
    while t <= limit:
        if feat % t == 0:
            best = t
        t += 128
    return best


def _make_tiled_kernel(S, inv_denom, inv_count):
    def kernel(x_ref, o_ref, acc_ref):
        j = pl.program_id(0)

        @pl.when(j == 0)
        def _init():
            acc_ref[...] = jnp.zeros_like(acc_ref)

        @pl.when(j < S)
        def _copy_and_reduce():
            xv = x_ref[...]                               # (n, T), native dtype
            o_ref[...] = xv                               # passthrough store
            xf = xv.astype(jnp.float32)
            mu = jnp.mean(xf, axis=0, keepdims=True)      # (1, T)
            var = jnp.sum((xf - mu) ** 2, axis=0, keepdims=True) * inv_denom
            # Per-lane accumulation (elementwise VPU add); the cross-lane
            # reduction happens exactly once, in the mean-slab step below.
            acc_ref[...] += jnp.sqrt(var)                 # (1, T)

        @pl.when(j >= S)
        def _write_mean_slab():
            m = jnp.sum(acc_ref[...], keepdims=True) * inv_count     # (1, 1)
            # Ragged output block: only the first H*W of the T columns are in
            # bounds; Pallas masks the out-of-range writeback.
            o_ref[...] = jnp.broadcast_to(m, o_ref.shape).astype(o_ref.dtype)

    return kernel


def _make_single_block_kernel(n, feat, hw, inv_denom, inv_count):
    # Rare fallback for C*H*W not a multiple of 128: whole tensor as one block
    # (block shapes equal the full array dims, so no (8,128) constraint).
    def kernel(x_ref, o_ref):
        xv = x_ref[...]                                   # (n, feat)
        o_ref[:, :feat] = xv
        xf = xv.astype(jnp.float32)
        mu = jnp.mean(xf, axis=0, keepdims=True)
        var = jnp.sum((xf - mu) ** 2, axis=0, keepdims=True) * inv_denom
        std = jnp.sqrt(var)                               # (1, feat)
        m = jnp.sum(std, keepdims=True) * inv_count       # (1, 1)
        o_ref[:, feat:] = jnp.broadcast_to(m, (n, hw)).astype(o_ref.dtype)

    return kernel


def minibatch_std(x, *, max_tile_bytes=4 * 1024 * 1024):
    """x: (N, C, H, W) -> (N, C+1, H, W), matching ProGAN Minibatch_std."""
    n, c, h, w = x.shape
    hw = h * w
    feat = c * hw
    out_cols = feat + hw
    xf = x.reshape(n, feat)                               # lane-dense layout
    out_shape = jax.ShapeDtypeStruct((n, out_cols), x.dtype)

    # Unbiased (N-1) std, matching torch.std.  N == 1 yields NaN, like torch.
    inv_denom = (1.0 / (n - 1)) if n > 1 else float("nan")
    inv_count = 1.0 / float(feat)

    esize = jnp.dtype(x.dtype).itemsize
    T = _choose_tile(feat, n, esize, max_tile_bytes)

    if T is None:
        out = pl.pallas_call(
            _make_single_block_kernel(n, feat, hw, inv_denom, inv_count),
            out_shape=out_shape,
            in_specs=[pl.BlockSpec((n, feat), lambda: (0, 0))],
            out_specs=pl.BlockSpec((n, out_cols), lambda: (0, 0)),
        )(xf)
        return out.reshape(n, c + 1, h, w)

    S = feat // T                  # copy/reduce grid steps
    S_slab = pl.cdiv(hw, T)        # mean-slab grid steps (usually 1, ragged)

    out = pl.pallas_call(
        _make_tiled_kernel(S, inv_denom, inv_count),
        out_shape=out_shape,
        grid=(S + S_slab,),
        in_specs=[
            # Clamp the block index on the mean-slab steps: that block is
            # never read there and the repeated index lets the pipeline skip
            # the redundant DMA entirely.
            pl.BlockSpec((n, T), lambda j: (0, jnp.minimum(j, S - 1))),
        ],
        out_specs=pl.BlockSpec((n, T), lambda j: (0, j)),
        scratch_shapes=[pltpu.VMEM((1, T), jnp.float32)],
        compiler_params=pltpu.CompilerParams(
            # The sum(std) accumulator is carried across the whole grid, so
            # the axis must be sequential.
            dimension_semantics=("arbitrary",),
            # v5e's default scoped VMEM is 16 MiB; 32 MiB is safe on all
            # generations (v7x physical VMEM is 64 MiB) and covers the
            # double-buffered <=4 MiB input/output blocks plus scratch.
            vmem_limit_bytes=32 * 1024 * 1024,
        ),
    )(xf)
    return out.reshape(n, c + 1, h, w)


def _reference(x):
    std = jnp.std(x.astype(jnp.float32), axis=0, ddof=1)
    m = jnp.mean(std)
    rep = jnp.full((x.shape[0], 1, x.shape[2], x.shape[3]), m, dtype=x.dtype)
    return jnp.concatenate([x, rep], axis=1)


if __name__ == "__main__":
    key = jax.random.PRNGKey(0)
    k0, k1, k2 = jax.random.split(key, 3)

    def _check(x, **kw):
        out = jax.block_until_ready(minibatch_std(x, **kw))
        ref = _reference(x)
        assert out.shape == ref.shape, (out.shape, ref.shape)
        assert jnp.allclose(out, ref, atol=1e-5, rtol=1e-5)

    # Small NCHW input consistent with the module's forward.
    _check(jax.random.normal(k0, (2, 4, 16, 16), dtype=jnp.float32))
    # ProGAN-style 4x4 spatial (H*W = 16 < 128): exercises the ragged
    # mean-slab block on the tiled path (previously fell back to one block).
    _check(jax.random.normal(k1, (2, 8, 4, 4), dtype=jnp.float32))
    # Tiny per-buffer cap forces multiple feature tiles, exercising the
    # carried per-lane accumulator across grid steps.
    _check(jax.random.normal(k2, (4, 8, 8, 8), dtype=jnp.float32),
           max_tile_bytes=4 * 4 * 128)

    print("KERNEL_OK")
</pallas_src>

<mosaic_0001>
module attributes {stable_mosaic.version = 11 : i64} {
  func.func @kernel(%arg0: i32, %arg1: memref<2x1024xf32, #tpu.memory_space<vmem>>, %arg2: memref<2x1024xf32, #tpu.memory_space<vmem>>, %arg3: memref<1x1024xf32, #tpu.memory_space<vmem>>) attributes {dimension_semantics = [#tpu.dimension_semantics<arbitrary>], iteration_bounds = array<i64: 2>, scalar_prefetch = 0 : i64, scratch_operands = 1 : i64, tpu.core_type = #tpu.core_type<tc>, window_params = [{transform_indices = @transform_0, window_bounds = array<i64: 2, 1024>}, {transform_indices = @transform_1, window_bounds = array<i64: 2, 1024>}]} {
    %c0_i32 = arith.constant 0 : i32
    %0 = arith.cmpi eq, %arg0, %c0_i32 : i32
    %1 = arith.extui %0 : i1 to i32
    %c0_i32_0 = arith.constant 0 : i32
    %2 = arith.cmpi ne, %1, %c0_i32_0 : i32
    scf.if %2 {
      %cst = arith.constant 0.000000e+00 : f32
      %9 = vector.broadcast %cst : f32 to vector<1x1024xf32>
      %c0 = arith.constant 0 : index
      %c0_4 = arith.constant 0 : index
      %10 = vector.load %arg3[%c0, %c0_4] : memref<1x1024xf32, #tpu.memory_space<vmem>>, vector<1x1024xf32>
      tpu.vector_store %arg3[%c0, %c0_4], %9 {strides = array<i32>} : memref<1x1024xf32, #tpu.memory_space<vmem>>, vector<1x1024xf32>,
    } else {
    }
    %c1_i32 = arith.constant 1 : i32
    %3 = arith.cmpi slt, %arg0, %c1_i32 : i32
    %4 = arith.extui %3 : i1 to i32
    %c0_i32_1 = arith.constant 0 : i32
    %5 = arith.cmpi ne, %4, %c0_i32_1 : i32
    scf.if %5 {
      %c0 = arith.constant 0 : index
      %c0_4 = arith.constant 0 : index
      %9 = vector.load %arg1[%c0, %c0_4] : memref<2x1024xf32, #tpu.memory_space<vmem>>, vector<2x1024xf32>
      %c0_5 = arith.constant 0 : index
      %c0_6 = arith.constant 0 : index
      %10 = vector.load %arg2[%c0_5, %c0_6] : memref<2x1024xf32, #tpu.memory_space<vmem>>, vector<2x1024xf32>
      tpu.vector_store %arg2[%c0_5, %c0_6], %9 {strides = array<i32>} : memref<2x1024xf32, #tpu.memory_space<vmem>>, vector<2x1024xf32>,
      %cst = arith.constant dense<0.000000e+00> : vector<1024xf32>
      %11 = vector.multi_reduction <add>, %9, %cst [0] : vector<2x1024xf32> to vector<1024xf32>
      %12 = vector.shape_cast %11 : vector<1024xf32> to vector<1x1024xf32>
      %cst_7 = arith.constant 2.000000e+00 : f32
      %13 = vector.broadcast %cst_7 : f32 to vector<1x1024xf32>
      %14 = arith.divf %12, %13 : vector<1x1024xf32>
      %15 = vector.broadcast %14 : vector<1x1024xf32> to vector<2x1024xf32>
      %16 = arith.subf %9, %15 : vector<2x1024xf32>
      %17 = arith.mulf %16, %16 : vector<2x1024xf32>
      %cst_8 = arith.constant dense<0.000000e+00> : vector<1024xf32>
      %18 = vector.multi_reduction <add>, %17, %cst_8 [0] : vector<2x1024xf32> to vector<1024xf32>
      %19 = vector.shape_cast %18 : vector<1024xf32> to vector<1x1024xf32>
      %cst_9 = arith.constant 1.000000e+00 : f32
      %20 = vector.broadcast %cst_9 : f32 to vector<1x1024xf32>
      %21 = arith.mulf %19, %20 : vector<1x1024xf32>
      %c0_10 = arith.constant 0 : index
      %c0_11 = arith.constant 0 : index
      %22 = vector.load %arg3[%c0_10, %c0_11] : memref<1x1024xf32, #tpu.memory_space<vmem>>, vector<1x1024xf32>
      %23 = math.sqrt %21 : vector<1x1024xf32>
      %24 = arith.addf %22, %23 : vector<1x1024xf32>
      %c0_12 = arith.constant 0 : index
      %c0_13 = arith.constant 0 : index
      %25 = vector.load %arg3[%c0_12, %c0_13] : memref<1x1024xf32, #tpu.memory_space<vmem>>, vector<1x1024xf32>
      tpu.vector_store %arg3[%c0_12, %c0_13], %24 {strides = array<i32>} : memref<1x1024xf32, #tpu.memory_space<vmem>>, vector<1x1024xf32>,
    } else {
    }
    %c1_i32_2 = arith.constant 1 : i32
    %6 = arith.cmpi sge, %arg0, %c1_i32_2 : i32
    %7 = arith.extui %6 : i1 to i32
    %c0_i32_3 = arith.constant 0 : i32
    %8 = arith.cmpi ne, %7, %c0_i32_3 : i32
    scf.if %8 {
      %c0 = arith.constant 0 : index
      %c0_4 = arith.constant 0 : index
      %9 = vector.load %arg3[%c0, %c0_4] : memref<1x1024xf32, #tpu.memory_space<vmem>>, vector<1x1024xf32>
      %10 = vector.shape_cast %9 : vector<1x1024xf32> to vector<1x1x1024xf32>
      %cst = arith.constant dense<0.000000e+00> : vector<1xf32>
      %11 = vector.multi_reduction <add>, %10, %cst [1, 2] : vector<1x1x1024xf32> to vector<1xf32>
      %12 = vector.shape_cast %11 : vector<1xf32> to vector<1x1x1xf32>
      %13 = vector.extract %12[0, 0, 0] : f32 from vector<1x1x1xf32>
      %14 = vector.broadcast %13 : f32 to vector<1x1xf32>
      %cst_5 = arith.constant 9.765625E-4 : f32
      %15 = vector.broadcast %cst_5 : f32 to vector<1x1xf32>
      %16 = arith.mulf %14, %15 : vector<1x1xf32>
      %17 = vector.shape_cast %16 : vector<1x1xf32> to vector<1x1xf32>
      %18 = vector.broadcast %17 : vector<1x1xf32> to vector<2x1024xf32>
      %c0_6 = arith.constant 0 : index
      %c0_7 = arith.constant 0 : index
      %19 = vector.load %arg2[%c0_6, %c0_7] : memref<2x1024xf32, #tpu.memory_space<vmem>>, vector<2x1024xf32>
      tpu.vector_store %arg2[%c0_6, %c0_7], %18 {strides = array<i32>} : memref<2x1024xf32, #tpu.memory_space<vmem>>, vector<2x1024xf32>,
    } else {
    }
    return
  }
  func.func @transform_0(%arg0: i32) -> (i32, i32) {
    %c0_i32 = arith.constant 0 : i32
    %0 = arith.minsi %arg0, %c0_i32 : i32
    %c0_i32_0 = arith.constant 0 : i32
    %c0_i32_1 = arith.constant 0 : i32
    return %c0_i32_0, %0 : i32, i32
  }
  func.func @transform_1(%arg0: i32) -> (i32, i32) {
    %c0_i32 = arith.constant 0 : i32
    %c0_i32_0 = arith.constant 0 : i32
    return %c0_i32, %arg0 : i32, i32
  }
}

</mosaic_0001>

<llo_original>
// kernel: tpu_custom_call.1
$region0: #{tpu_custom_call.1}
  #allocation0 [shape = 'u32[]', space=smem, size = 0x4, offset = 0x4, fixed_abs, tag = 'smem constant byte address 0x4 - core index']
  #allocation1 [shape = 'u32[144,128]{1,0:T(1,128)}', space=vmem, size = 0x12000, scoped, tag = 'internal scratch']
  #allocation2 [shape = 'f32[1,1024]{1,0:T(1,128)}', space=vmem, size = 0x1000, scoped, tag = 'scratch operand']
  %s0 = inlined_call_operand.hbm [shape: f32[2,1024], index: 0, kind: input, shape index: {}]
  %s1 = inlined_call_operand.hbm [shape: f32[2,1280], index: 1, kind: output, shape index: {}]
  %s2 = sld [smem:[#allocation0]]
  $region53: #{tpu_custom_call.1} parent=0
    _
  %s4 = ssub.s32 1, %s2
  %s5 = scalar_select 0, %s4, %s2
  $region1: #{tpu_custom_call.1} parent=0
    #allocation3 [shape = 'u8[16384]{0}', space=vmem, size = 0x4000, scoped, tag = 'input window, operand 0']
    #allocation4 [shape = 's32[2]{0}', space=sflag, size = 0x8, scoped, tag = 'scoped memory for tpu_custom_call.1']
    #allocation5 [shape = 's32[2]{0}', space=sflag, size = 0x8, scoped, tag = 'scoped memory for tpu_custom_call.1']
    #allocation6 [shape = 'u8[16384]{0}', space=vmem, size = 0x4000, scoped, tag = 'output window, operand 0']
    %6 = vsyncpa [#allocation4], 0
    %s7 = scalar_lea.sflag [#allocation4], 1
    %8 = vsyncpa %s7, 0
    %9 = vsyncpa [#allocation5], 0
    %s10 = scalar_lea.sflag [#allocation5], 1
    %11 = vsyncpa %s10, 0
    loop: start=0, step=1, limit=4
    $region2: #{tpu_custom_call.1} parent=1 // loop_pre_header
      _
    $region3: #{tpu_custom_call.1} parent=1 // loop_header
      %s13 = sphi 0, %s17
      %p14 = scmp.ge.s32.totalorder %s13, 4
      %s27 = sphi 0, %s29
      %s30 = sphi 0, %s27
      %s31 = sphi 0, %s30
      %s47 = sphi 0, %s31
      %s53 = sphi 0, %s55
      %s56 = sphi 0, %s53
      %s57 = sphi 0, %s56
      %s73 = sphi 0, %s57
    $region4: #{tpu_custom_call.1} parent=1 // loop_header_branch
      %16 = sbr.rel (%p14) target = $region8
    $region5: #{tpu_custom_call.1} parent=1 // loop_body
      %s18 = ssub.s32 %s13, 1
      %s19 = ssub.s32 %s13, 2
      %s20 = sadd.s32 %s13, 1
      %p21 = scmp.lt.s32.totalorder %s13, 0
      %s22 = scalar_select %p21, %s13, 0
      %p23 = scmp.lt.s32.totalorder %s20, 0
      %s24 = scalar_select %p23, %s20, 0
      %s25 = ssub.s32 %s22, %s24
      %p26 = scmp.eq.s32.totalorder %s25, 0
      %s28 = sadd.s32 %s27, 1
      %s29 = scalar_select %p26, %s27, %s28
      %p32 = pneg %p26
      %p33 = scmp.eq.s32.totalorder %s13, 1
      %p34 = por %p32, %p33
      %p35 = scmp.ne.s32.totalorder %s27, %s30
      %p36 = scmp.eq.s32.totalorder %s13, 0
      %p37 = por %p35, %p36
      %p38 = scmp.ne.s32.totalorder %s27, %s30
      %p39 = scmp.eq.s32.totalorder %s18, 1
      %p40 = por %p38, %p39
      %p41 = scmp.ne.s32.totalorder %s30, %s31
      %p42 = scmp.eq.s32.totalorder %s18, 0
      %p43 = por %p41, %p42
      %p44 = scmp.ne.s32.totalorder %s30, %s31
      %p45 = scmp.eq.s32.totalorder %s19, 1
      %p46 = por %p44, %p45
      %p48 = scmp.ne.s32.totalorder %s31, %s47
      %p49 = scmp.eq.s32.totalorder %s19, 0
      %p50 = por %p48, %p49
      %s51 = ssub.s32 %s13, %s20
      %p52 = scmp.eq.s32.totalorder %s51, 0
      %s54 = sadd.s32 %s53, 1
      %s55 = scalar_select %p52, %s53, %s54
      %p58 = pneg %p52
      %p59 = scmp.eq.s32.totalorder %s13, 1
      %p60 = por %p58, %p59
      %p61 = scmp.ne.s32.totalorder %s53, %s56
      %p62 = scmp.eq.s32.totalorder %s13, 0
      %p63 = por %p61, %p62
      %p64 = scmp.ne.s32.totalorder %s53, %s56
      %p65 = scmp.eq.s32.totalorder %s18, 1
      %p66 = por %p64, %p65
      %p67 = scmp.ne.s32.totalorder %s56, %s57
      %p68 = scmp.eq.s32.totalorder %s18, 0
      %p69 = por %p67, %p68
      %p70 = scmp.ne.s32.totalorder %s56, %s57
      %p71 = scmp.eq.s32.totalorder %s19, 1
      %p72 = por %p70, %p71
      %p74 = scmp.ne.s32.totalorder %s57, %s73
      %p75 = scmp.eq.s32.totalorder %s19, 0
      %p76 = por %p74, %p75
      %p77 = scmp.le.s32.totalorder 1, %s13
      %p78 = scmp.lt.s32.totalorder %s13, 3
      %p79 = pnand %p77, %p78
      %p80 = pneg %p79
      // Predicated region
      $region9: #{tpu_custom_call.1} parent=5 // pred_check
        _
      $region10: #{tpu_custom_call.1} parent=5 // pred_check_branch
        %82 = sbr.rel (%p79) target = $region12
      $region11: #{tpu_custom_call.1} parent=5 // pred_region
        %s83 = ssub.s32 %s13, 1
      $region12: #{tpu_custom_call.1} parent=5 // pred_fallthru
        _
      %p84 = scmp.lt.s32.totalorder %s13, 2
      // Predicated region
      $region13: #{tpu_custom_call.1} parent=5 // pred_check
        %p85 = pneg %p84
      $region14: #{tpu_custom_call.1} parent=5 // pred_check_branch
        %87 = sbr.rel (%p85) target = $region16
      $region15: #{tpu_custom_call.1} parent=5 // pred_region
        // Predicated region
        $region17: #{tpu_custom_call.1} parent=15 // pred_check
          %p88 = pneg %p37
        $region18: #{tpu_custom_call.1} parent=15 // pred_check_branch
          %90 = sbr.rel (%p88) target = $region20
        $region19: #{tpu_custom_call.1} parent=15 // pred_region
          %s91 = sand.u32 %s27, 1
          %s92 = scalar_lea.sflag [#allocation4], %s91
          %s93 = sand.u32 %s27, 1
          %s94 = smul.addr %s93, 16
          %s95 = scalar_lea.vmem [#allocation3], %s94
          %p96 = scmp.lt.s32.totalorder %s13, 0
          %s97 = scalar_select %p96, %s13, 0
          %s98 = smul.u32 8, %s97
          %s100 = ssub.s32 256, 256
          %101 = vsyncadd %s92, %s100
          %s102 = smul.addr %s98, 32
          %s103 = scalar_lea.hbm %s0, %s102
          %s105 = sshll.u32 %s95, 4
          %s106 = int_to_ptr.vmem [resolvable:$true] %s105
          %108 = dma.hbm_to_vmem [thread:$0]  %s103, 256, %s106, %s92
        $region20: #{tpu_custom_call.1} parent=15 // pred_fallthru
          _
      $region16: #{tpu_custom_call.1} parent=5 // pred_fallthru
        _
      %p109 = scmp.le.s32.totalorder 1, %s13
      %p110 = scmp.lt.s32.totalorder %s13, 3
      %p111 = pnand %p109, %p110
      %p112 = pneg %p111
      // Predicated region
      $region21: #{tpu_custom_call.1} parent=5 // pred_check
        _
      $region22: #{tpu_custom_call.1} parent=5 // pred_check_branch
        %114 = sbr.rel (%p111) target = $region24
      $region23: #{tpu_custom_call.1} parent=5 // pred_region
        %s115 = ssub.s32 %s13, 1
        %s116 = sand.u32 %s30, 1
        %s117 = scalar_lea.sflag [#allocation4], %s116
        %s118 = sand.u32 %s30, 1
        %s119 = smul.addr %s118, 16
        %s120 = scalar_lea.vmem [#allocation3], %s119
        // Predicated region
        $region25: #{tpu_custom_call.1} parent=23 // pred_check
          %p121 = pneg %p43
        $region26: #{tpu_custom_call.1} parent=23 // pred_check_branch
          %123 = sbr.rel (%p121) target = $region28
        $region27: #{tpu_custom_call.1} parent=23 // pred_region
          %124 = dma.done %s117, 256
        $region28: #{tpu_custom_call.1} parent=23 // pred_fallthru
          _
        %s125 = sand.u32 %s30, 1
        %s126 = scalar_lea.sflag [#allocation4], %s125
        %s127 = sand.u32 %s30, 1
        %s128 = smul.addr %s127, 16
        %s129 = scalar_lea.vmem [#allocation3], %s128
        %p130 = pneg %p43
        %p131 = pneg %p40
        %p132 = pneg %p69
        %p133 = pneg %p66
        %s134 = sand.u32 %s56, 1
        %s135 = scalar_lea.sflag [#allocation5], %s134
        %s136 = sand.u32 %s56, 1
        %s137 = smul.addr %s136, 16
        %s138 = scalar_lea.vmem [#allocation6], %s137
        %p139 = scmp.lt.s32.totalorder %s18, 0
        %s140 = scalar_select %p139, %s18, 0
        %s141 = smul.u32 8, %s140
        %s142 = smul.u32 8, %s18
        %s143 = ssub.s32 10, %s142
        %p144 = scmp.lt.s32.totalorder %s143, 8
        %s145 = scalar_select %p144, %s143, 8
        %s146 = smul.u32 32, %s145
        %p147 = scmp.eq.s32.totalorder %s18, 0
        // Predicated region
        $region29: #{tpu_custom_call.1} parent=23 // pred_check
          %p148 = pneg %p147
        $region30: #{tpu_custom_call.1} parent=23 // pred_check_branch
          %150 = sbr.rel (%p148) target = $region32
        $region31: #{tpu_custom_call.1} parent=23 // pred_region
          %151 = vst [vmem:[#allocation2] sm:$0xff] 0.0
        $region32: #{tpu_custom_call.1} parent=23 // pred_fallthru
          _
        %p152 = scmp.lt.s32.totalorder %s18, 1
        // Predicated region
        $region33: #{tpu_custom_call.1} parent=23 // pred_check
          %p153 = pneg %p152
        $region34: #{tpu_custom_call.1} parent=23 // pred_check_branch
          %155 = sbr.rel (%p153) target = $region36
        $region35: #{tpu_custom_call.1} parent=23 // pred_region
          %v156 = vld [vmem:[%s120] sm:$0xff]
          %v157 = vld [vmem:[%s120 + $0x8] sm:$0xff]
          %158 = vst [vmem:[%s138] sm:$0xff] %v156
          %159 = vst [vmem:[%s138 + $0x8] sm:$0xff] %v157
          %v162 = vcombine.high %v156, %v156
          %v164 = vunpack.c.l.s4 1983009808
          %v165 = vunpack.c.0.s8 %v164
          %v166 = vlaneseq
          %v167 = vshrl.u32 %v166, 7
          %v168 = vsub.s32 %v165, %v167
          %v169 = vrot.slane %v156, %v168
          %v171 = vunpack.c.l.s4 1983009808
          %v172 = vunpack.c.0.s8 %v171
          %v173 = vlaneseq
          %v174 = vshrl.u32 %v173, 7
          %v175 = vsub.s32 %v172, %v174
          %v176 = vrot.slane %v162, %v175
          %v177 = vcombine.high %v169, %v169
          %v178 = vcombine.high %v176, %v176
          %v179 = vcombine.high %v157, %v157
          %v181 = vunpack.c.l.s4 1983009808
          %v182 = vunpack.c.0.s8 %v181
          %v183 = vlaneseq
          %v184 = vshrl.u32 %v183, 7
          %v185 = vsub.s32 %v182, %v184
          %v186 = vrot.slane %v157, %v185
          %v188 = vunpack.c.l.s4 1983009808
          %v189 = vunpack.c.0.s8 %v188
          %v190 = vlaneseq
          %v191 = vshrl.u32 %v190, 7
          %v192 = vsub.s32 %v189, %v191
          %v193 = vrot.slane %v179, %v192
          %v194 = vcombine.high %v186, %v186
          %v195 = vcombine.high %v193, %v193
          %vm204 = vcmask 1041408
          %v205 = vsel %vm204, %v169, 0.0
          %v206 = vrot.slane %v205, 4
          %v207 = vadd.f32 %v205, %v206
          %v208 = vrot.slane %v207, 2
          %v209 = vadd.f32 %v207, %v208
          %v210 = vrot.slane %v209, 1
          %v211 = vadd.f32 %v209, %v210
          %v212 = vsel %vm204, %v177, 0.0
          %v213 = vrot.slane %v212, 4
          %v214 = vadd.f32 %v212, %v213
          %v215 = vrot.slane %v214, 2
          %v216 = vadd.f32 %v214, %v215
          %v217 = vrot.slane %v216, 1
          %v218 = vadd.f32 %v216, %v217
          %v219 = vsel %vm204, %v176, 0.0
          %v220 = vrot.slane %v219, 4
          %v221 = vadd.f32 %v219, %v220
          %v222 = vrot.slane %v221, 2
          %v223 = vadd.f32 %v221, %v222
          %v224 = vrot.slane %v223, 1
          %v225 = vadd.f32 %v223, %v224
          %v226 = vsel %vm204, %v178, 0.0
          %v227 = vrot.slane %v226, 4
          %v228 = vadd.f32 %v226, %v227
          %v229 = vrot.slane %v228, 2
          %v230 = vadd.f32 %v228, %v229
          %v231 = vrot.slane %v230, 1
          %v232 = vadd.f32 %v230, %v231
          %v233 = vsel %vm204, %v186, 0.0
          %v234 = vrot.slane %v233, 4
          %v235 = vadd.f32 %v233, %v234
          %v236 = vrot.slane %v235, 2
          %v237 = vadd.f32 %v235, %v236
          %v238 = vrot.slane %v237, 1
          %v239 = vadd.f32 %v237, %v238
          %v240 = vsel %vm204, %v194, 0.0
          %v241 = vrot.slane %v240, 4
          %v242 = vadd.f32 %v240, %v241
          %v243 = vrot.slane %v242, 2
          %v244 = vadd.f32 %v242, %v243
          %v245 = vrot.slane %v244, 1
          %v246 = vadd.f32 %v244, %v245
          %v247 = vsel %vm204, %v193, 0.0
          %v248 = vrot.slane %v247, 4
          %v249 = vadd.f32 %v247, %v248
          %v250 = vrot.slane %v249, 2
          %v251 = vadd.f32 %v249, %v250
          %v252 = vrot.slane %v251, 1
          %v253 = vadd.f32 %v251, %v252
          %v254 = vsel %vm204, %v195, 0.0
          %v255 = vrot.slane %v254, 4
          %v256 = vadd.f32 %v254, %v255
          %v257 = vrot.slane %v256, 2
          %v258 = vadd.f32 %v256, %v257
          %v259 = vrot.slane %v258, 1
          %v260 = vadd.f32 %v258, %v259
          %v261 = vrcp.pop 2.0
          %v262 = vmul.f32 %v211, %v261
          %v263 = vmul.f32 %v218, %v261
          %v264 = vmul.f32 %v225, %v261
          %v265 = vmul.f32 %v232, %v261
          %v266 = vmul.f32 %v239, %v261
          %v267 = vmul.f32 %v246, %v261
          %v268 = vmul.f32 %v253, %v261
          %v269 = vmul.f32 %v260, %v261
          %v278 = vcombine.low %v262, %v263
          %v279 = vcombine.low %v264, %v265
          %v281 = vunpack.c.l.s4 1983009808
          %v282 = vunpack.c.0.s8 %v281
          %v283 = vlaneseq
          %v284 = vshrl.u32 %v283, 7
          %v285 = vsub.s32 %v282, %v284
          %v286 = vrot.slane %v278, %v285
          %v288 = vunpack.c.l.s4 1983009808
          %v289 = vunpack.c.0.s8 %v288
          %v290 = vlaneseq
          %v291 = vshrl.u32 %v290, 7
          %v292 = vsub.s32 %v289, %v291
          %v293 = vrot.slane %v279, %v292
          %v294 = vcombine.low %v286, %v293
          %v295 = vcombine.low %v266, %v267
          %v296 = vcombine.low %v268, %v269
          %v298 = vunpack.c.l.s4 1983009808
          %v299 = vunpack.c.0.s8 %v298
          %v300 = vlaneseq
          %v301 = vshrl.u32 %v300, 7
          %v302 = vsub.s32 %v299, %v301
          %v303 = vrot.slane %v295, %v302
          %v305 = vunpack.c.l.s4 1983009808
          %v306 = vunpack.c.0.s8 %v305
          %v307 = vlaneseq
          %v308 = vshrl.u32 %v307, 7
          %v309 = vsub.s32 %v306, %v308
          %v310 = vrot.slane %v296, %v309
          %v311 = vcombine.low %v303, %v310
          %v314 = vsub.f32 %v156, %v294
          %v315 = vsub.f32 %v157, %v311
          %v316 = vmul.f32 %v314, %v314
          %v317 = vmul.f32 %v315, %v315
          %v320 = vcombine.high %v316, %v316
          %v322 = vunpack.c.l.s4 1983009808
          %v323 = vunpack.c.0.s8 %v322
          %v324 = vlaneseq
          %v325 = vshrl.u32 %v324, 7
          %v326 = vsub.s32 %v323, %v325
          %v327 = vrot.slane %v316, %v326
          %v329 = vunpack.c.l.s4 1983009808
          %v330 = vunpack.c.0.s8 %v329
          %v331 = vlaneseq
          %v332 = vshrl.u32 %v331, 7
          %v333 = vsub.s32 %v330, %v332
          %v334 = vrot.slane %v320, %v333
          %v335 = vcombine.high %v327, %v327
          %v336 = vcombine.high %v334, %v334
          %v337 = vcombine.high %v317, %v317
          %v339 = vunpack.c.l.s4 1983009808
          %v340 = vunpack.c.0.s8 %v339
          %v341 = vlaneseq
          %v342 = vshrl.u32 %v341, 7
          %v343 = vsub.s32 %v340, %v342
          %v344 = vrot.slane %v317, %v343
          %v346 = vunpack.c.l.s4 1983009808
          %v347 = vunpack.c.0.s8 %v346
          %v348 = vlaneseq
          %v349 = vshrl.u32 %v348, 7
          %v350 = vsub.s32 %v347, %v349
          %v351 = vrot.slane %v337, %v350
          %v352 = vcombine.high %v344, %v344
          %v353 = vcombine.high %v351, %v351
          %v362 = vsel %vm204, %v327, 0.0
          %v363 = vrot.slane %v362, 4
          %v364 = vadd.f32 %v362, %v363
          %v365 = vrot.slane %v364, 2
          %v366 = vadd.f32 %v364, %v365
          %v367 = vrot.slane %v366, 1
          %v368 = vadd.f32 %v366, %v367
          %v369 = vsel %vm204, %v335, 0.0
          %v370 = vrot.slane %v369, 4
          %v371 = vadd.f32 %v369, %v370
          %v372 = vrot.slane %v371, 2
          %v373 = vadd.f32 %v371, %v372
          %v374 = vrot.slane %v373, 1
          %v375 = vadd.f32 %v373, %v374
          %v376 = vsel %vm204, %v334, 0.0
          %v377 = vrot.slane %v376, 4
          %v378 = vadd.f32 %v376, %v377
          %v379 = vrot.slane %v378, 2
          %v380 = vadd.f32 %v378, %v379
          %v381 = vrot.slane %v380, 1
          %v382 = vadd.f32 %v380, %v381
          %v383 = vsel %vm204, %v336, 0.0
          %v384 = vrot.slane %v383, 4
          %v385 = vadd.f32 %v383, %v384
          %v386 = vrot.slane %v385, 2
          %v387 = vadd.f32 %v385, %v386
          %v388 = vrot.slane %v387, 1
          %v389 = vadd.f32 %v387, %v388
          %v390 = vsel %vm204, %v344, 0.0
          %v391 = vrot.slane %v390, 4
          %v392 = vadd.f32 %v390, %v391
          %v393 = vrot.slane %v392, 2
          %v394 = vadd.f32 %v392, %v393
          %v395 = vrot.slane %v394, 1
          %v396 = vadd.f32 %v394, %v395
          %v397 = vsel %vm204, %v352, 0.0
          %v398 = vrot.slane %v397, 4
          %v399 = vadd.f32 %v397, %v398
          %v400 = vrot.slane %v399, 2
          %v401 = vadd.f32 %v399, %v400
          %v402 = vrot.slane %v401, 1
          %v403 = vadd.f32 %v401, %v402
          %v404 = vsel %vm204, %v351, 0.0
          %v405 = vrot.slane %v404, 4
          %v406 = vadd.f32 %v404, %v405
          %v407 = vrot.slane %v406, 2
          %v408 = vadd.f32 %v406, %v407
          %v409 = vrot.slane %v408, 1
          %v410 = vadd.f32 %v408, %v409
          %v411 = vsel %vm204, %v353, 0.0
          %v412 = vrot.slane %v411, 4
          %v413 = vadd.f32 %v411, %v412
          %v414 = vrot.slane %v413, 2
          %v415 = vadd.f32 %v413, %v414
          %v416 = vrot.slane %v415, 1
          %v417 = vadd.f32 %v415, %v416
          %v418 = vld [vmem:[#allocation2] sm:$0xff]
          %v419 = vrsqrt.pop %v368
          %v420 = vmul.f32 %v368, %v419
          %vm421 = vcmp.eq.f32.partialorder %v368, inf
          %v422 = vsel %vm421, %v368, %v420
          %vm423 = vcmp.eq.f32.partialorder %v368, 0.0
          %v424 = vand.u32 %v368, 2147483648
          %v425 = vsel %vm423, %v424, %v422
          %v426 = vrsqrt.pop %v375
          %v427 = vmul.f32 %v375, %v426
          %vm428 = vcmp.eq.f32.partialorder %v375, inf
          %v429 = vsel %vm428, %v375, %v427
          %vm430 = vcmp.eq.f32.partialorder %v375, 0.0
          %v431 = vand.u32 %v375, 2147483648
          %v432 = vsel %vm430, %v431, %v429
          %v433 = vrsqrt.pop %v382
          %v434 = vmul.f32 %v382, %v433
          %vm435 = vcmp.eq.f32.partialorder %v382, inf
          %v436 = vsel %vm435, %v382, %v434
          %vm437 = vcmp.eq.f32.partialorder %v382, 0.0
          %v438 = vand.u32 %v382, 2147483648
          %v439 = vsel %vm437, %v438, %v436
          %v440 = vrsqrt.pop %v389
          %v441 = vmul.f32 %v389, %v440
          %vm442 = vcmp.eq.f32.partialorder %v389, inf
          %v443 = vsel %vm442, %v389, %v441
          %vm444 = vcmp.eq.f32.partialorder %v389, 0.0
          %v445 = vand.u32 %v389, 2147483648
          %v446 = vsel %vm444, %v445, %v443
          %v447 = vrsqrt.pop %v396
          %v448 = vmul.f32 %v396, %v447
          %vm449 = vcmp.eq.f32.partialorder %v396, inf
          %v450 = vsel %vm449, %v396, %v448
          %vm451 = vcmp.eq.f32.partialorder %v396, 0.0
          %v452 = vand.u32 %v396, 2147483648
          %v453 = vsel %vm451, %v452, %v450
          %v454 = vrsqrt.pop %v403
          %v455 = vmul.f32 %v403, %v454
          %vm456 = vcmp.eq.f32.partialorder %v403, inf
          %v457 = vsel %vm456, %v403, %v455
          %vm458 = vcmp.eq.f32.partialorder %v403, 0.0
          %v459 = vand.u32 %v403, 2147483648
          %v460 = vsel %vm458, %v459, %v457
          %v461 = vrsqrt.pop %v410
          %v462 = vmul.f32 %v410, %v461
          %vm463 = vcmp.eq.f32.partialorder %v410, inf
          %v464 = vsel %vm463, %v410, %v462
          %vm465 = vcmp.eq.f32.partialorder %v410, 0.0
          %v466 = vand.u32 %v410, 2147483648
          %v467 = vsel %vm465, %v466, %v464
          %v468 = vrsqrt.pop %v417
          %v469 = vmul.f32 %v417, %v468
          %vm470 = vcmp.eq.f32.partialorder %v417, inf
          %v471 = vsel %vm470, %v417, %v469
          %vm472 = vcmp.eq.f32.partialorder %v417, 0.0
          %v473 = vand.u32 %v417, 2147483648
          %v474 = vsel %vm472, %v473, %v471
          %v483 = vcombine.low %v425, %v432
          %v484 = vcombine.low %v439, %v446
          %v485 = vcombine.low %v453, %v460
          %v486 = vcombine.low %v467, %v474
          %v488 = vunpack.c.l.s4 1966171168
          %v489 = vunpack.c.0.s8 %v488
          %v490 = vlaneseq
          %v491 = vshrl.u32 %v490, 7
          %v492 = vsub.s32 %v489, %v491
          %v493 = vrot.slane %v483, %v492
          %v495 = vunpack.c.l.s4 1966171168
          %v496 = vunpack.c.0.s8 %v495
          %v497 = vlaneseq
          %v498 = vshrl.u32 %v497, 7
          %v499 = vsub.s32 %v496, %v498
          %v500 = vrot.slane %v484, %v499
          %v502 = vunpack.c.l.s4 1966171168
          %v503 = vunpack.c.0.s8 %v502
          %v504 = vlaneseq
          %v505 = vshrl.u32 %v504, 7
          %v506 = vsub.s32 %v503, %v505
          %v507 = vrot.slane %v485, %v506
          %v509 = vunpack.c.l.s4 1966171168
          %v510 = vunpack.c.0.s8 %v509
          %v511 = vlaneseq
          %v512 = vshrl.u32 %v511, 7
          %v513 = vsub.s32 %v510, %v512
          %v514 = vrot.slane %v486, %v513
          %v515 = vcombine.low %v493, %v500
          %v516 = vcombine.low %v507, %v514
          %v518 = vunpack.c.l.s4 1966171168
          %v519 = vunpack.c.0.s8 %v518
          %v520 = vlaneseq
          %v521 = vshrl.u32 %v520, 7
          %v522 = vsub.s32 %v519, %v521
          %v523 = vrot.slane %v515, %v522
          %v525 = vunpack.c.l.s4 1966171168
          %v526 = vunpack.c.0.s8 %v525
          %v527 = vlaneseq
          %v528 = vshrl.u32 %v527, 7
          %v529 = vsub.s32 %v526, %v528
          %v530 = vrot.slane %v516, %v529
          %v531 = vcombine.low %v523, %v530
          %v533 = vadd.f32 %v418, %v531
          %534 = vst [vmem:[#allocation2] sm:$0xff] %v533
        $region36: #{tpu_custom_call.1} parent=23 // pred_fallthru
          _
        %p535 = scmp.ge.s32.totalorder %s18, 1
        // Predicated region
        $region37: #{tpu_custom_call.1} parent=23 // pred_check
          %p536 = pneg %p535
        $region38: #{tpu_custom_call.1} parent=23 // pred_check_branch
          %538 = sbr.rel (%p536) target = $region40
        $region39: #{tpu_custom_call.1} parent=23 // pred_region
          %v539 = vld [vmem:[#allocation2] sm:$0xff]
          %v541 = vlaneseq
          %v542 = vshrl.u32 %v541, 7
          %v543 = vsub.s32 0, %v542
          %v544 = vrot.slane %v539, %v543
          %v545 = vlaneseq
          %v546 = vshrl.u32 %v545, 7
          %v547 = vsub.s32 1, %v546
          %v548 = vrot.slane %v539, %v547
          %v549 = vlaneseq
          %v550 = vshrl.u32 %v549, 7
          %v551 = vsub.s32 2, %v550
          %v552 = vrot.slane %v539, %v551
          %v553 = vlaneseq
          %v554 = vshrl.u32 %v553, 7
          %v555 = vsub.s32 3, %v554
          %v556 = vrot.slane %v539, %v555
          %v557 = vlaneseq
          %v558 = vshrl.u32 %v557, 7
          %v559 = vsub.s32 4, %v558
          %v560 = vrot.slane %v539, %v559
          %v561 = vlaneseq
          %v562 = vshrl.u32 %v561, 7
          %v563 = vsub.s32 5, %v562
          %v564 = vrot.slane %v539, %v563
          %v565 = vlaneseq
          %v566 = vshrl.u32 %v565, 7
          %v567 = vsub.s32 6, %v566
          %v568 = vrot.slane %v539, %v567
          %v569 = vlaneseq
          %v570 = vshrl.u32 %v569, 7
          %v571 = vsub.s32 7, %v570
          %v572 = vrot.slane %v539, %v571
          %vm581 = vcmask 1040384
          %v582 = vsel %vm581, %v544, 0.0
          %v583 = vsel %vm581, %v548, 0.0
          %v584 = vadd.f32 %v582, %v583
          %v585 = vsel %vm581, %v552, 0.0
          %v586 = vadd.f32 %v584, %v585
          %v587 = vsel %vm581, %v556, 0.0
          %v588 = vadd.f32 %v586, %v587
          %v589 = vsel %vm581, %v560, 0.0
          %v590 = vadd.f32 %v588, %v589
          %v591 = vsel %vm581, %v564, 0.0
          %v592 = vadd.f32 %v590, %v591
          %v593 = vsel %vm581, %v568, 0.0
          %v594 = vadd.f32 %v592, %v593
          %v595 = vsel %vm581, %v572, 0.0
          %v596 = vadd.f32 %v594, %v595
          %597 = vadd.xlane.f32.xlu0 %v596
          %v598 = vpop.xlane.xlu0 %597
          %v599 = vrot.slane %v598, 4
          %v600 = vadd.f32 %v598, %v599
          %v601 = vrot.slane %v600, 2
          %v602 = vadd.f32 %v600, %v601
          %v603 = vrot.slane %v602, 1
          %v604 = vadd.f32 %v602, %v603
          %s605 = vtos %v604
          %v606 = vstv %s605
          %v607 = vmul.f32 %v606, 0.0009765625
          %608 = vst [vmem:[%s138] sm:$0xff] %v607
          %609 = vst [vmem:[%s138 + $0x8] sm:$0xff] %v607
        $region40: #{tpu_custom_call.1} parent=23 // pred_fallthru
          _
        %s610 = sand.u32 %s56, 1
        %s611 = scalar_lea.sflag [#allocation5], %s610
        %s612 = sand.u32 %s56, 1
        %s613 = smul.addr %s612, 16
        %s614 = scalar_lea.vmem [#allocation6], %s613
        // Predicated region
        $region41: #{tpu_custom_call.1} parent=23 // pred_check
          %p615 = pneg %p66
        $region42: #{tpu_custom_call.1} parent=23 // pred_check_branch
          %617 = sbr.rel (%p615) target = $region44
        $region43: #{tpu_custom_call.1} parent=23 // pred_region
          %s618 = smul.u32 8, %s18
          %s619 = ssub.s32 10, %s618
          %p620 = scmp.lt.s32.totalorder %s619, 8
          %s621 = scalar_select %p620, %s619, 8
          %s622 = smul.u32 32, %s621
          %s624 = ssub.s32 256, %s622
          %625 = vsyncadd %s611, %s624
          %p626 = scmp.ne.s32.totalorder 0, %s622
          %s627 = smul.addr %s618, 32
          %s628 = scalar_lea.hbm %s1, %s627
          %s629 = smul.u32 %s621, 2
          %s630 = sshll.u32 %s629, 4
          %s631 = sshll.u32 %s614, 4
          %s632 = int_to_ptr.vmem [resolvable:$true] %s631
          %634 = dma.vmem_to_hbm [thread:$0]  (%p626), %s632, %s630, %s628, %s611
        $region44: #{tpu_custom_call.1} parent=23 // pred_fallthru
          _
      $region24: #{tpu_custom_call.1} parent=5 // pred_fallthru
        _
      %p635 = scmp.le.s32.totalorder 2, %s13
      // Predicated region
      $region45: #{tpu_custom_call.1} parent=5 // pred_check
        %p636 = pneg %p635
      $region46: #{tpu_custom_call.1} parent=5 // pred_check_branch
        %638 = sbr.rel (%p636) target = $region48
      $region47: #{tpu_custom_call.1} parent=5 // pred_region
        %s639 = ssub.s32 %s13, 2
        // Predicated region
        $region49: #{tpu_custom_call.1} parent=47 // pred_check
          %p640 = pneg %p72
        $region50: #{tpu_custom_call.1} parent=47 // pred_check_branch
          %642 = sbr.rel (%p640) target = $region52
        $region51: #{tpu_custom_call.1} parent=47 // pred_region
          %s643 = sand.u32 %s57, 1
          %s644 = scalar_lea.sflag [#allocation5], %s643
          %s645 = sand.u32 %s57, 1
          %s646 = smul.addr %s645, 16
          %s647 = scalar_lea.vmem [#allocation6], %s646
          %648 = dma.done %s644, 256
        $region52: #{tpu_custom_call.1} parent=47 // pred_fallthru
          _
      $region48: #{tpu_custom_call.1} parent=5 // pred_fallthru
        _
    $region6: #{tpu_custom_call.1} parent=1 // loop_footer
      %s17 = sadd.s32 1, %s13
    $region7: #{tpu_custom_call.1} parent=1 // loop_footer_branch
      %12 = sbr.rel target = $region3
    $region8: #{tpu_custom_call.1} parent=1 // loop_exit
      _
    %649 = vsyncpa [#allocation4], 1
    %s650 = scalar_lea.sflag [#allocation4], 1
    %651 = vsyncpa %s650, 1
    %652 = vsyncpa [#allocation5], 1
    %s653 = scalar_lea.sflag [#allocation5], 1
    %654 = vsyncpa %s653, 1

</llo_original>
